<compile_context>
chip_gen: v7x
topology: tpu7x:2x2x1
jax: 0.10.0
libtpu: 0.0.40
codegen_flags: <defaults>
</compile_context>

<pallas_src>
import jax
import jax.numpy as jnp
from jax.experimental import pallas as pl
from jax.experimental.pallas import tpu as pltpu

EMB_DIM = 64  # from Model.__init__
# NOTE: the PyTorch code divides by emb_dim ** (-0.5), i.e. MULTIPLIES by sqrt(emb_dim).
SCALE = float(EMB_DIM) ** 0.5

TQ_CAP = 256    # q-tile cap (rows of the score tile per grid step)
TK_CAP = 1024   # kv-tile cap; large tiles amortize per-step rescale + grid overhead


def _flash_attn_kernel(q_ref, k_ref, v_ref, o_ref, qb_sc, m_sc, l_sc, acc_sc):
    # q_ref: (Bblk, tq, D)   k_ref/v_ref: (Bblk, tk, D)   o_ref: (Bblk, tq, D)
    kv_idx = pl.program_id(2)

    @pl.when(kv_idx == 0)
    def _init():
        # Fold the sqrt(emb_dim) scale into q ONCE per (b, qi) tile and keep the
        # bf16 operand resident in scratch for every kv step.
        qb_sc[...] = (q_ref[...] * SCALE).astype(jnp.bfloat16)
        m_sc[...] = jnp.full(m_sc.shape, -jnp.inf, dtype=m_sc.dtype)
        l_sc[...] = jnp.zeros(l_sc.shape, dtype=l_sc.dtype)
        acc_sc[...] = jnp.zeros(acc_sc.shape, dtype=acc_sc.dtype)

    # QK^T: bf16 operands, f32 accumulation; contract on the feature dim so the
    # MXU sees k un-transposed (no XLU transpose).
    s = jnp.einsum(
        "bqd,bkd->bqk",
        qb_sc[...],
        k_ref[...].astype(jnp.bfloat16),
        preferred_element_type=jnp.float32,
    )  # (Bblk, tq, tk) f32

    m_prev = m_sc[...]
    m_new = jnp.maximum(m_prev, s.max(axis=-1, keepdims=True))
    alpha = jnp.exp(m_prev - m_new)
    p = jnp.exp(s - m_new)

    l_sc[...] = alpha * l_sc[...] + p.sum(axis=-1, keepdims=True)
    # P@V: bf16 operands (explicit casts), f32 accumulation in scratch.
    acc_sc[...] = alpha * acc_sc[...] + jnp.einsum(
        "bqk,bkd->bqd",
        p.astype(jnp.bfloat16),
        v_ref[...].astype(jnp.bfloat16),
        preferred_element_type=jnp.float32,
    )
    m_sc[...] = m_new

    @pl.when(kv_idx == pl.num_programs(2) - 1)
    def _finalize():
        # dropout with p=0 is the identity -> nothing to do.
        inv_l = pl.reciprocal(l_sc[...], approx=True)  # EUP rcp slot, ~free
        o_ref[...] = (acc_sc[...] * inv_l).astype(o_ref.dtype)


def _pick_tile(length, cap):
    """Largest tile <= cap that divides `length` (multiple of 8), else full length."""
    if length <= cap:
        return length
    t = (cap // 8) * 8
    while t >= 8:
        if length % t == 0:
            return t
        t -= 8
    return length  # no aligned divisor; fall back to one full block along this axis


def _pick_bblk(batch, tiny):
    """Batch block size: fold tiny problems, but keep >= 2 parallel grid blocks
    (when batch >= 2) so both v7x TensorCores get work."""
    if not tiny or batch == 1:
        return 1
    target = max(1, batch // 2)
    for cand in range(target, 0, -1):
        if batch % cand == 0:
            return cand
    return 1


def attention(q, k, v, *, tq_cap=TQ_CAP, tk_cap=TK_CAP):
    B, Lq, D = q.shape
    Bk, Lk, Dk = k.shape
    assert (Bk, Dk) == (B, D) and v.shape == (B, Lk, D)

    tq = _pick_tile(Lq, tq_cap)
    tk = _pick_tile(Lk, tk_cap)
    tiny = (Lq <= 128) and (Lk <= 128)
    bblk = _pick_bblk(B, tiny)

    grid = (B // bblk, Lq // tq, Lk // tk)

    itemsize = jnp.dtype(q.dtype).itemsize
    # Working set: double-buffered q/k/v/o blocks, f32 acc + m/l scratch, bf16 q
    # scratch, and the (tq, tk) score/prob f32 intermediates.
    io_bytes = 2 * bblk * (2 * tq * D + 2 * tk * D) * itemsize
    scratch_bytes = bblk * (tq * D * 4 + tq * D * 2 + 2 * tq * 4)
    interm_bytes = 2 * bblk * tq * tk * 4
    vmem_bytes = io_bytes + scratch_bytes + interm_bytes
    # Computed estimate x2 + margin, clamped to stay well inside v7x's 64 MiB.
    vmem_limit = int(min(max(2 * vmem_bytes + (8 << 20), 16 << 20), 40 << 20))

    cost = pl.CostEstimate(
        flops=4 * B * Lq * Lk * D,            # two matmuls, 2*M*N*K each
        transcendentals=B * Lq * Lk,          # exp
        bytes_accessed=itemsize * (2 * B * Lq * D + 2 * B * Lk * D * (Lq // tq)),
    )

    return pl.pallas_call(
        _flash_attn_kernel,
        out_shape=jax.ShapeDtypeStruct((B, Lq, D), q.dtype),
        grid_spec=pltpu.PrefetchScalarGridSpec(
            num_scalar_prefetch=0,
            grid=grid,
            in_specs=[
                pl.BlockSpec((bblk, tq, D), lambda b, qi, ki: (b, qi, 0)),
                pl.BlockSpec((bblk, tk, D), lambda b, qi, ki: (b, ki, 0)),
                pl.BlockSpec((bblk, tk, D), lambda b, qi, ki: (b, ki, 0)),
            ],
            out_specs=pl.BlockSpec((bblk, tq, D), lambda b, qi, ki: (b, qi, 0)),
            scratch_shapes=[
                pltpu.VMEM((bblk, tq, D), jnp.bfloat16),  # scaled q operand
                pltpu.VMEM((bblk, tq, 1), jnp.float32),   # running max m
                pltpu.VMEM((bblk, tq, 1), jnp.float32),   # running denom l
                pltpu.VMEM((bblk, tq, D), jnp.float32),   # running accumulator
            ],
        ),
        compiler_params=pltpu.CompilerParams(
            dimension_semantics=("parallel", "parallel", "arbitrary"),
            vmem_limit_bytes=vmem_limit,
        ),
        cost_estimate=cost,
    )(q, k, v)


def _reference(q, k, v):
    # Faithful f32 reference of the PyTorch forward (note: scale MULTIPLIES by
    # sqrt(emb_dim), mirroring `div(emb_dim ** -0.5)`).
    s = jnp.einsum("bqd,bkd->bqk", q, k,
                   preferred_element_type=jnp.float32,
                   precision=jax.lax.Precision.HIGHEST) * SCALE
    p = jax.nn.softmax(s, axis=-1)
    return jnp.einsum("bqk,bkd->bqd", p, v,
                      preferred_element_type=jnp.float32,
                      precision=jax.lax.Precision.HIGHEST)


if __name__ == "__main__":
    key = jax.random.PRNGKey(0)
    kq, kk, kv_ = jax.random.split(key, 3)

    # Small, mutually-consistent shapes implied by the module (emb_dim = 64).
    # Moderate q/k magnitudes keep the *sqrt(emb_dim)-amplified logits
    # well-conditioned so the bf16-operand kernel can be checked against the
    # f32 reference with a meaningful tolerance.
    B, Lq, Lk, D = 2, 8, 8, EMB_DIM
    q = 0.15 * jax.random.normal(kq, (B, Lq, D), dtype=jnp.float32)
    k = 0.15 * jax.random.normal(kk, (B, Lk, D), dtype=jnp.float32)
    v = jax.random.normal(kv_, (B, Lk, D), dtype=jnp.float32)

    out = jax.block_until_ready(attention(q, k, v))
    ref = _reference(q, k, v)
    assert out.shape == (B, Lq, D)
    assert jnp.allclose(out, ref, atol=2e-2, rtol=2e-2), "mismatch vs JAX reference (small)"

    # Tiled flash path: multiple q- and kv-tiles (tile caps overridden so the
    # online-softmax accumulation across kv blocks is exercised).
    B2, L2 = 2, 512
    q2 = 0.10 * jax.random.normal(kq, (B2, L2, D), dtype=jnp.float32)
    k2 = 0.10 * jax.random.normal(kk, (B2, L2, D), dtype=jnp.float32)
    v2 = jax.random.normal(kv_, (B2, L2, D), dtype=jnp.float32)
    out2 = jax.block_until_ready(attention(q2, k2, v2, tq_cap=128, tk_cap=128))
    ref2 = _reference(q2, k2, v2)
    assert jnp.allclose(out2, ref2, atol=2e-2, rtol=2e-2), "mismatch vs JAX reference (tiled)"

    print("KERNEL_OK")
</pallas_src>

<mosaic_0001>
module attributes {stable_mosaic.version = 11 : i64} {
  func.func @_flash_attn_kernel(%arg0: i32, %arg1: i32, %arg2: i32, %arg3: memref<1x8x64xf32, #tpu.memory_space<vmem>>, %arg4: memref<1x8x64xf32, #tpu.memory_space<vmem>>, %arg5: memref<1x8x64xf32, #tpu.memory_space<vmem>>, %arg6: memref<1x8x64xf32, #tpu.memory_space<vmem>>, %arg7: memref<1x8x64xbf16, #tpu.memory_space<vmem>>, %arg8: memref<1x8x1xf32, #tpu.memory_space<vmem>>, %arg9: memref<1x8x1xf32, #tpu.memory_space<vmem>>, %arg10: memref<1x8x64xf32, #tpu.memory_space<vmem>>) attributes {dimension_semantics = [#tpu.dimension_semantics<parallel>, #tpu.dimension_semantics<parallel>, #tpu.dimension_semantics<arbitrary>], iteration_bounds = array<i64: 2, 1, 1>, scalar_prefetch = 0 : i64, scratch_operands = 4 : i64, tpu.core_type = #tpu.core_type<tc>, window_params = [{transform_indices = @transform_0, window_bounds = array<i64: 1, 8, 64>}, {transform_indices = @transform_1, window_bounds = array<i64: 1, 8, 64>}, {transform_indices = @transform_2, window_bounds = array<i64: 1, 8, 64>}, {transform_indices = @transform_3, window_bounds = array<i64: 1, 8, 64>}]} {
    %c0_i32 = arith.constant 0 : i32
    %0 = arith.cmpi eq, %arg2, %c0_i32 : i32
    %1 = arith.extui %0 : i1 to i32
    %c0_i32_0 = arith.constant 0 : i32
    %2 = arith.cmpi ne, %1, %c0_i32_0 : i32
    scf.if %2 {
      %c0_32 = arith.constant 0 : index
      %c0_33 = arith.constant 0 : index
      %c0_34 = arith.constant 0 : index
      %35 = vector.load %arg3[%c0_32, %c0_33, %c0_34] : memref<1x8x64xf32, #tpu.memory_space<vmem>>, vector<1x8x64xf32>
      %cst_35 = arith.constant 8.000000e+00 : f32
      %36 = vector.broadcast %cst_35 : f32 to vector<1x8x64xf32>
      %37 = arith.mulf %35, %36 : vector<1x8x64xf32>
      %38 = arith.truncf %37 : vector<1x8x64xf32> to vector<1x8x64xbf16>
      %c0_36 = arith.constant 0 : index
      %c0_37 = arith.constant 0 : index
      %c0_38 = arith.constant 0 : index
      %39 = vector.load %arg7[%c0_36, %c0_37, %c0_38] : memref<1x8x64xbf16, #tpu.memory_space<vmem>>, vector<1x8x64xbf16>
      tpu.vector_store %arg7[%c0_36, %c0_37, %c0_38], %38 {strides = array<i32>} : memref<1x8x64xbf16, #tpu.memory_space<vmem>>, vector<1x8x64xbf16>,
      %cst_39 = arith.constant 0xFF800000 : f32
      %40 = vector.broadcast %cst_39 : f32 to vector<1x8x1xf32>
      %c0_40 = arith.constant 0 : index
      %c0_41 = arith.constant 0 : index
      %c0_42 = arith.constant 0 : index
      %41 = vector.load %arg8[%c0_40, %c0_41, %c0_42] : memref<1x8x1xf32, #tpu.memory_space<vmem>>, vector<1x8x1xf32>
      tpu.vector_store %arg8[%c0_40, %c0_41, %c0_42], %40 {strides = array<i32>} : memref<1x8x1xf32, #tpu.memory_space<vmem>>, vector<1x8x1xf32>,
      %cst_43 = arith.constant 0.000000e+00 : f32
      %42 = vector.broadcast %cst_43 : f32 to vector<1x8x1xf32>
      %c0_44 = arith.constant 0 : index
      %c0_45 = arith.constant 0 : index
      %c0_46 = arith.constant 0 : index
      %43 = vector.load %arg9[%c0_44, %c0_45, %c0_46] : memref<1x8x1xf32, #tpu.memory_space<vmem>>, vector<1x8x1xf32>
      tpu.vector_store %arg9[%c0_44, %c0_45, %c0_46], %42 {strides = array<i32>} : memref<1x8x1xf32, #tpu.memory_space<vmem>>, vector<1x8x1xf32>,
      %cst_47 = arith.constant 0.000000e+00 : f32
      %44 = vector.broadcast %cst_47 : f32 to vector<1x8x64xf32>
      %c0_48 = arith.constant 0 : index
      %c0_49 = arith.constant 0 : index
      %c0_50 = arith.constant 0 : index
      %45 = vector.load %arg10[%c0_48, %c0_49, %c0_50] : memref<1x8x64xf32, #tpu.memory_space<vmem>>, vector<1x8x64xf32>
      tpu.vector_store %arg10[%c0_48, %c0_49, %c0_50], %44 {strides = array<i32>} : memref<1x8x64xf32, #tpu.memory_space<vmem>>, vector<1x8x64xf32>,
    } else {
    }
    %c0 = arith.constant 0 : index
    %c0_1 = arith.constant 0 : index
    %c0_2 = arith.constant 0 : index
    %3 = vector.load %arg7[%c0, %c0_1, %c0_2] : memref<1x8x64xbf16, #tpu.memory_space<vmem>>, vector<1x8x64xbf16>
    %c0_3 = arith.constant 0 : index
    %c0_4 = arith.constant 0 : index
    %c0_5 = arith.constant 0 : index
    %4 = vector.load %arg4[%c0_3, %c0_4, %c0_5] : memref<1x8x64xf32, #tpu.memory_space<vmem>>, vector<1x8x64xf32>
    %5 = arith.truncf %4 : vector<1x8x64xf32> to vector<1x8x64xbf16>
    "tpu.trace_start"() <{level = 10 : i32, message = "bqd,bkd->bqk"}> : () -> ()
    %cst = arith.constant dense<0.000000e+00> : vector<1x8x8xf32>
    %6 = tpu.matmul %3, %5, %cst {dimension_numbers = #tpu.dot_dimension_numbers<[2], [2], [1], [1], [0, 0, 0, 1, 1, 1], [0], [0]>} : vector<1x8x64xbf16>, vector<1x8x64xbf16>, vector<1x8x8xf32> -> vector<1x8x8xf32>
    "tpu.trace_stop"() : () -> ()
    %c0_6 = arith.constant 0 : index
    %c0_7 = arith.constant 0 : index
    %c0_8 = arith.constant 0 : index
    %7 = vector.load %arg8[%c0_6, %c0_7, %c0_8] : memref<1x8x1xf32, #tpu.memory_space<vmem>>, vector<1x8x1xf32>
    %cst_9 = arith.constant dense<0xFF800000> : vector<1x8xf32>
    %8 = vector.multi_reduction <maximumf>, %6, %cst_9 [2] : vector<1x8x8xf32> to vector<1x8xf32>
    %9 = vector.shape_cast %8 : vector<1x8xf32> to vector<1x8x1xf32>
    %10 = arith.maximumf %7, %9 : vector<1x8x1xf32>
    %11 = arith.subf %7, %10 : vector<1x8x1xf32>
    %12 = math.exp %11 : vector<1x8x1xf32>
    %13 = vector.broadcast %10 : vector<1x8x1xf32> to vector<1x8x8xf32>
    %14 = arith.subf %6, %13 : vector<1x8x8xf32>
    %15 = math.exp %14 : vector<1x8x8xf32>
    %c0_10 = arith.constant 0 : index
    %c0_11 = arith.constant 0 : index
    %c0_12 = arith.constant 0 : index
    %16 = vector.load %arg9[%c0_10, %c0_11, %c0_12] : memref<1x8x1xf32, #tpu.memory_space<vmem>>, vector<1x8x1xf32>
    %17 = arith.mulf %12, %16 : vector<1x8x1xf32>
    %cst_13 = arith.constant dense<0.000000e+00> : vector<1x8xf32>
    %18 = vector.multi_reduction <add>, %15, %cst_13 [2] : vector<1x8x8xf32> to vector<1x8xf32>
    %19 = vector.shape_cast %18 : vector<1x8xf32> to vector<1x8x1xf32>
    %20 = arith.addf %17, %19 : vector<1x8x1xf32>
    %c0_14 = arith.constant 0 : index
    %c0_15 = arith.constant 0 : index
    %c0_16 = arith.constant 0 : index
    %21 = vector.load %arg9[%c0_14, %c0_15, %c0_16] : memref<1x8x1xf32, #tpu.memory_space<vmem>>, vector<1x8x1xf32>
    tpu.vector_store %arg9[%c0_14, %c0_15, %c0_16], %20 {strides = array<i32>} : memref<1x8x1xf32, #tpu.memory_space<vmem>>, vector<1x8x1xf32>,
    %c0_17 = arith.constant 0 : index
    %c0_18 = arith.constant 0 : index
    %c0_19 = arith.constant 0 : index
    %22 = vector.load %arg10[%c0_17, %c0_18, %c0_19] : memref<1x8x64xf32, #tpu.memory_space<vmem>>, vector<1x8x64xf32>
    %23 = vector.broadcast %12 : vector<1x8x1xf32> to vector<1x8x64xf32>
    %24 = arith.mulf %23, %22 : vector<1x8x64xf32>
    %25 = arith.truncf %15 : vector<1x8x8xf32> to vector<1x8x8xbf16>
    %c0_20 = arith.constant 0 : index
    %c0_21 = arith.constant 0 : index
    %c0_22 = arith.constant 0 : index
    %26 = vector.load %arg5[%c0_20, %c0_21, %c0_22] : memref<1x8x64xf32, #tpu.memory_space<vmem>>, vector<1x8x64xf32>
    %27 = arith.truncf %26 : vector<1x8x64xf32> to vector<1x8x64xbf16>
    "tpu.trace_start"() <{level = 10 : i32, message = "bqk,bkd->bqd"}> : () -> ()
    %cst_23 = arith.constant dense<0.000000e+00> : vector<1x8x64xf32>
    %28 = tpu.matmul %25, %27, %cst_23 {dimension_numbers = #tpu.dot_dimension_numbers<[2], [1], [1], [2], [0, 0, 0, 1, 1, 2], [0], [0]>} : vector<1x8x8xbf16>, vector<1x8x64xbf16>, vector<1x8x64xf32> -> vector<1x8x64xf32>
    "tpu.trace_stop"() : () -> ()
    %29 = arith.addf %24, %28 : vector<1x8x64xf32>
    %c0_24 = arith.constant 0 : index
    %c0_25 = arith.constant 0 : index
    %c0_26 = arith.constant 0 : index
    %30 = vector.load %arg10[%c0_24, %c0_25, %c0_26] : memref<1x8x64xf32, #tpu.memory_space<vmem>>, vector<1x8x64xf32>
    tpu.vector_store %arg10[%c0_24, %c0_25, %c0_26], %29 {strides = array<i32>} : memref<1x8x64xf32, #tpu.memory_space<vmem>>, vector<1x8x64xf32>,
    %c0_27 = arith.constant 0 : index
    %c0_28 = arith.constant 0 : index
    %c0_29 = arith.constant 0 : index
    %31 = vector.load %arg8[%c0_27, %c0_28, %c0_29] : memref<1x8x1xf32, #tpu.memory_space<vmem>>, vector<1x8x1xf32>
    tpu.vector_store %arg8[%c0_27, %c0_28, %c0_29], %10 {strides = array<i32>} : memref<1x8x1xf32, #tpu.memory_space<vmem>>, vector<1x8x1xf32>,
    %c0_i32_30 = arith.constant 0 : i32
    %32 = arith.cmpi eq, %arg2, %c0_i32_30 : i32
    %33 = arith.extui %32 : i1 to i32
    %c0_i32_31 = arith.constant 0 : i32
    %34 = arith.cmpi ne, %33, %c0_i32_31 : i32
    scf.if %34 {
      %c0_32 = arith.constant 0 : index
      %c0_33 = arith.constant 0 : index
      %c0_34 = arith.constant 0 : index
      %35 = vector.load %arg9[%c0_32, %c0_33, %c0_34] : memref<1x8x1xf32, #tpu.memory_space<vmem>>, vector<1x8x1xf32>
      %36 = tpu.reciprocal %35 {approx = true} : vector<1x8x1xf32> -> vector<1x8x1xf32>
      %c0_35 = arith.constant 0 : index
      %c0_36 = arith.constant 0 : index
      %c0_37 = arith.constant 0 : index
      %37 = vector.load %arg10[%c0_35, %c0_36, %c0_37] : memref<1x8x64xf32, #tpu.memory_space<vmem>>, vector<1x8x64xf32>
      %38 = vector.broadcast %36 : vector<1x8x1xf32> to vector<1x8x64xf32>
      %39 = arith.mulf %37, %38 : vector<1x8x64xf32>
      %c0_38 = arith.constant 0 : index
      %c0_39 = arith.constant 0 : index
      %c0_40 = arith.constant 0 : index
      %40 = vector.load %arg6[%c0_38, %c0_39, %c0_40] : memref<1x8x64xf32, #tpu.memory_space<vmem>>, vector<1x8x64xf32>
      tpu.vector_store %arg6[%c0_38, %c0_39, %c0_40], %39 {strides = array<i32>} : memref<1x8x64xf32, #tpu.memory_space<vmem>>, vector<1x8x64xf32>,
    } else {
    }
    return
  }
  func.func @transform_0(%arg0: i32, %arg1: i32, %arg2: i32) -> (i32, i32, i32) {
    %c0_i32 = arith.constant 0 : i32
    %c0_i32_0 = arith.constant 0 : i32
    return %arg0, %arg1, %c0_i32 : i32, i32, i32
  }
  func.func @transform_1(%arg0: i32, %arg1: i32, %arg2: i32) -> (i32, i32, i32) {
    %c0_i32 = arith.constant 0 : i32
    %c0_i32_0 = arith.constant 0 : i32
    return %arg0, %arg2, %c0_i32 : i32, i32, i32
  }
  func.func @transform_2(%arg0: i32, %arg1: i32, %arg2: i32) -> (i32, i32, i32) {
    %c0_i32 = arith.constant 0 : i32
    %c0_i32_0 = arith.constant 0 : i32
    return %arg0, %arg2, %c0_i32 : i32, i32, i32
  }
  func.func @transform_3(%arg0: i32, %arg1: i32, %arg2: i32) -> (i32, i32, i32) {
    %c0_i32 = arith.constant 0 : i32
    %c0_i32_0 = arith.constant 0 : i32
    return %arg0, %arg1, %c0_i32 : i32, i32, i32
  }
}

</mosaic_0001>

<llo_original>
// kernel: tpu_custom_call.1
$region0: #{tpu_custom_call.1}
  #allocation0 [shape = 'u32[]', space=smem, size = 0x4, offset = 0x4, fixed_abs, tag = 'smem constant byte address 0x4 - core index']
  #allocation1 [shape = 'u32[144,128]{1,0:T(1,128)}', space=vmem, size = 0x12000, scoped, tag = 'internal scratch']
  #allocation2 [shape = 'bf16[1,8,64]{2,1,0:T(8,128)(2,1)}', space=vmem, size = 0x800, scoped, tag = 'scratch operand']
  #allocation3 [shape = 'f32[1,8,1]{2,1,0:T(8,128)}', space=vmem, size = 0x1000, scoped, tag = 'scratch operand']
  #allocation4 [shape = 'f32[1,8,1]{2,1,0:T(8,128)}', space=vmem, size = 0x1000, scoped, tag = 'scratch operand']
  #allocation5 [shape = 'f32[1,8,64]{2,1,0:T(8,128)}', space=vmem, size = 0x1000, scoped, tag = 'scratch operand']
  %s0 = inlined_call_operand.hbm [shape: f32[2,8,64], index: 0, kind: input, shape index: {}]
  %s1 = inlined_call_operand.hbm [shape: f32[2,8,64], index: 1, kind: input, shape index: {}]
  %s2 = inlined_call_operand.hbm [shape: f32[2,8,64], index: 2, kind: input, shape index: {}]
  %s3 = inlined_call_operand.hbm [shape: f32[2,8,64], index: 3, kind: output, shape index: {}]
  %s4 = sld [smem:[#allocation0]]
  $region65: #{tpu_custom_call.1} parent=0
    _
  %s6 = ssub.s32 1, %s4
  %s7 = scalar_select 0, %s6, %s4
  $region1: #{tpu_custom_call.1} parent=0
    #allocation6 [shape = 'u8[8192]{0}', space=vmem, size = 0x2000, scoped, tag = 'input window, operand 0']
    #allocation7 [shape = 's32[2]{0}', space=sflag, size = 0x8, scoped, tag = 'scoped memory for tpu_custom_call.1']
    #allocation8 [shape = 's32[2]{0}', space=sflag, size = 0x8, scoped, tag = 'scoped memory for tpu_custom_call.1']
    #allocation9 [shape = 'u8[8192]{0}', space=vmem, size = 0x2000, scoped, tag = 'input window, operand 1']
    #allocation10 [shape = 's32[2]{0}', space=sflag, size = 0x8, scoped, tag = 'scoped memory for tpu_custom_call.1']
    #allocation11 [shape = 'u8[8192]{0}', space=vmem, size = 0x2000, scoped, tag = 'input window, operand 2']
    #allocation12 [shape = 'u8[8192]{0}', space=vmem, size = 0x2000, scoped, tag = 'output window, operand 0']
    %8 = vsyncpa [#allocation7], 0
    %s9 = scalar_lea.sflag [#allocation7], 1
    %10 = vsyncpa %s9, 0
    %11 = vsyncpa [#allocation10], 0
    %s12 = scalar_lea.sflag [#allocation10], 1
    %13 = vsyncpa %s12, 0
    %14 = vsyncpa [#allocation8], 0
    %s15 = scalar_lea.sflag [#allocation8], 1
    %16 = vsyncpa %s15, 0
    loop: start=0, step=1, limit=4
    $region2: #{tpu_custom_call.1} parent=1 // loop_pre_header
      _
    $region3: #{tpu_custom_call.1} parent=1 // loop_header
      %s18 = sphi 0, %s22
      %p19 = scmp.ge.s32.totalorder %s18, 4
      %s25 = sphi 0, %s44
      %s26 = sphi 0, %s40
      %s27 = sphi 0, %s36
      %s28 = sphi 0, %s25
      %s29 = sphi 0, %s26
      %s30 = sphi 0, %s27
      %s31 = sphi 0, %s28
      %s32 = sphi 0, %s29
      %s33 = sphi 0, %s30
      %s49 = sphi 0, %s51
      %s52 = sphi 0, %s49
      %s53 = sphi 0, %s52
      %s69 = sphi 0, %s53
      %s77 = sphi 0, %s79
      %s80 = sphi 0, %s77
      %s81 = sphi 0, %s80
      %s97 = sphi 0, %s81
      %s105 = sphi 0, %s107
      %s108 = sphi 0, %s105
      %s109 = sphi 0, %s108
      %s125 = sphi 0, %s109
      %s133 = sphi 0, %s135
      %s136 = sphi 0, %s133
      %s137 = sphi 0, %s136
      %s153 = sphi 0, %s137
    $region4: #{tpu_custom_call.1} parent=1 // loop_header_branch
      %21 = sbr.rel (%p19) target = $region8
    $region5: #{tpu_custom_call.1} parent=1 // loop_body
      %s23 = ssub.s32 %s18, 1
      %s24 = ssub.s32 %s18, 2
      %s34 = sadd.s32 1, %s27
      %p35 = scmp.ge.s32.totalorder %s34, 1
      %s36 = scalar_select %p35, 0, %s34
      %s37 = sadd.s32 1, %s26
      %s38 = scalar_select %p35, %s37, %s26
      %p39 = scmp.ge.s32.totalorder %s38, 1
      %s40 = scalar_select %p39, 0, %s38
      %s41 = sadd.s32 1, %s25
      %s42 = scalar_select %p39, %s41, %s25
      %p43 = scmp.ge.s32.totalorder %s42, 2
      %s44 = scalar_select %p43, 0, %s42
      %s45 = ssub.s32 %s25, %s44
      %s46 = ssub.s32 %s26, %s40
      %s47 = sor.u32 %s45, %s46
      %p48 = scmp.eq.s32.totalorder %s47, 0
      %s50 = sadd.s32 %s49, 1
      %s51 = scalar_select %p48, %s49, %s50
      %p54 = pneg %p48
      %p55 = scmp.eq.s32.totalorder %s18, 1
      %p56 = por %p54, %p55
      %p57 = scmp.ne.s32.totalorder %s49, %s52
      %p58 = scmp.eq.s32.totalorder %s18, 0
      %p59 = por %p57, %p58
      %p60 = scmp.ne.s32.totalorder %s49, %s52
      %p61 = scmp.eq.s32.totalorder %s23, 1
      %p62 = por %p60, %p61
      %p63 = scmp.ne.s32.totalorder %s52, %s53
      %p64 = scmp.eq.s32.totalorder %s23, 0
      %p65 = por %p63, %p64
      %p66 = scmp.ne.s32.totalorder %s52, %s53
      %p67 = scmp.eq.s32.totalorder %s24, 1
      %p68 = por %p66, %p67
      %p70 = scmp.ne.s32.totalorder %s53, %s69
      %p71 = scmp.eq.s32.totalorder %s24, 0
      %p72 = por %p70, %p71
      %s73 = ssub.s32 %s25, %s44
      %s74 = ssub.s32 %s27, %s36
      %s75 = sor.u32 %s73, %s74
      %p76 = scmp.eq.s32.totalorder %s75, 0
      %s78 = sadd.s32 %s77, 1
      %s79 = scalar_select %p76, %s77, %s78
      %p82 = pneg %p76
      %p83 = scmp.eq.s32.totalorder %s18, 1
      %p84 = por %p82, %p83
      %p85 = scmp.ne.s32.totalorder %s77, %s80
      %p86 = scmp.eq.s32.totalorder %s18, 0
      %p87 = por %p85, %p86
      %p88 = scmp.ne.s32.totalorder %s77, %s80
      %p89 = scmp.eq.s32.totalorder %s23, 1
      %p90 = por %p88, %p89
      %p91 = scmp.ne.s32.totalorder %s80, %s81
      %p92 = scmp.eq.s32.totalorder %s23, 0
      %p93 = por %p91, %p92
      %p94 = scmp.ne.s32.totalorder %s80, %s81
      %p95 = scmp.eq.s32.totalorder %s24, 1
      %p96 = por %p94, %p95
      %p98 = scmp.ne.s32.totalorder %s81, %s97
      %p99 = scmp.eq.s32.totalorder %s24, 0
      %p100 = por %p98, %p99
      %s101 = ssub.s32 %s25, %s44
      %s102 = ssub.s32 %s27, %s36
      %s103 = sor.u32 %s101, %s102
      %p104 = scmp.eq.s32.totalorder %s103, 0
      %s106 = sadd.s32 %s105, 1
      %s107 = scalar_select %p104, %s105, %s106
      %p110 = pneg %p104
      %p111 = scmp.eq.s32.totalorder %s18, 1
      %p112 = por %p110, %p111
      %p113 = scmp.ne.s32.totalorder %s105, %s108
      %p114 = scmp.eq.s32.totalorder %s18, 0
      %p115 = por %p113, %p114
      %p116 = scmp.ne.s32.totalorder %s105, %s108
      %p117 = scmp.eq.s32.totalorder %s23, 1
      %p118 = por %p116, %p117
      %p119 = scmp.ne.s32.totalorder %s108, %s109
      %p120 = scmp.eq.s32.totalorder %s23, 0
      %p121 = por %p119, %p120
      %p122 = scmp.ne.s32.totalorder %s108, %s109
      %p123 = scmp.eq.s32.totalorder %s24, 1
      %p124 = por %p122, %p123
      %p126 = scmp.ne.s32.totalorder %s109, %s125
      %p127 = scmp.eq.s32.totalorder %s24, 0
      %p128 = por %p126, %p127
      %s129 = ssub.s32 %s25, %s44
      %s130 = ssub.s32 %s26, %s40
      %s131 = sor.u32 %s129, %s130
      %p132 = scmp.eq.s32.totalorder %s131, 0
      %s134 = sadd.s32 %s133, 1
      %s135 = scalar_select %p132, %s133, %s134
      %p138 = pneg %p132
      %p139 = scmp.eq.s32.totalorder %s18, 1
      %p140 = por %p138, %p139
      %p141 = scmp.ne.s32.totalorder %s133, %s136
      %p142 = scmp.eq.s32.totalorder %s18, 0
      %p143 = por %p141, %p142
      %p144 = scmp.ne.s32.totalorder %s133, %s136
      %p145 = scmp.eq.s32.totalorder %s23, 1
      %p146 = por %p144, %p145
      %p147 = scmp.ne.s32.totalorder %s136, %s137
      %p148 = scmp.eq.s32.totalorder %s23, 0
      %p149 = por %p147, %p148
      %p150 = scmp.ne.s32.totalorder %s136, %s137
      %p151 = scmp.eq.s32.totalorder %s24, 1
      %p152 = por %p150, %p151
      %p154 = scmp.ne.s32.totalorder %s137, %s153
      %p155 = scmp.eq.s32.totalorder %s24, 0
      %p156 = por %p154, %p155
      %p157 = scmp.le.s32.totalorder 1, %s18
      %p158 = scmp.lt.s32.totalorder %s18, 3
      %p159 = pnand %p157, %p158
      %p160 = pneg %p159
      // Predicated region
      $region9: #{tpu_custom_call.1} parent=5 // pred_check
        _
      $region10: #{tpu_custom_call.1} parent=5 // pred_check_branch
        %162 = sbr.rel (%p159) target = $region12
      $region11: #{tpu_custom_call.1} parent=5 // pred_region
        %s163 = ssub.s32 %s18, 1
      $region12: #{tpu_custom_call.1} parent=5 // pred_fallthru
        _
      %p164 = scmp.lt.s32.totalorder %s18, 2
      // Predicated region
      $region13: #{tpu_custom_call.1} parent=5 // pred_check
        %p165 = pneg %p164
      $region14: #{tpu_custom_call.1} parent=5 // pred_check_branch
        %167 = sbr.rel (%p165) target = $region16
      $region15: #{tpu_custom_call.1} parent=5 // pred_region
        // Predicated region
        $region17: #{tpu_custom_call.1} parent=15 // pred_check
          %p168 = pneg %p59
        $region18: #{tpu_custom_call.1} parent=15 // pred_check_branch
          %170 = sbr.rel (%p168) target = $region20
        $region19: #{tpu_custom_call.1} parent=15 // pred_region
          %s171 = sand.u32 %s49, 1
          %s172 = scalar_lea.sflag [#allocation7], %s171
          %s173 = sand.u32 %s49, 1
          %s174 = smul.addr %s173, 8
          %s175 = scalar_lea.vmem [#allocation6], %s174
          %s177 = ssub.s32 128, 128
          %178 = vsyncadd %s172, %s177
          %s179 = sadd.s32 %s26, %s25
          %s180 = smul.addr %s179, 128
          %s181 = scalar_lea.hbm %s0, %s180
          %s183 = sshll.u32 %s175, 4
          %s184 = int_to_ptr.vmem [resolvable:$true] %s183
          %186 = dma.hbm_to_vmem [thread:$0]  %s181, 128, %s184, %s172
        $region20: #{tpu_custom_call.1} parent=15 // pred_fallthru
          _
        // Predicated region
        $region21: #{tpu_custom_call.1} parent=15 // pred_check
          %p187 = pneg %p87
        $region22: #{tpu_custom_call.1} parent=15 // pred_check_branch
          %189 = sbr.rel (%p187) target = $region24
        $region23: #{tpu_custom_call.1} parent=15 // pred_region
          %s190 = sand.u32 %s18, 1
          %s191 = scalar_lea.sflag [#allocation10], %s190
          %s192 = sand.u32 %s77, 1
          %s193 = smul.addr %s192, 8
          %s194 = scalar_lea.vmem [#allocation9], %s193
          %s196 = ssub.s32 128, 128
          %197 = vsyncadd %s191, %s196
          %s198 = sadd.s32 %s27, %s25
          %s199 = smul.addr %s198, 128
          %s200 = scalar_lea.hbm %s1, %s199
          %s202 = sshll.u32 %s194, 4
          %s203 = int_to_ptr.vmem [resolvable:$true] %s202
          %205 = dma.hbm_to_vmem [thread:$0]  %s200, 128, %s203, %s191
        $region24: #{tpu_custom_call.1} parent=15 // pred_fallthru
          _
        // Predicated region
        $region25: #{tpu_custom_call.1} parent=15 // pred_check
          %p206 = pneg %p115
        $region26: #{tpu_custom_call.1} parent=15 // pred_check_branch
          %208 = sbr.rel (%p206) target = $region28
        $region27: #{tpu_custom_call.1} parent=15 // pred_region
          %s209 = sand.u32 %s18, 1
          %s210 = scalar_lea.sflag [#allocation10], %s209
          %s211 = sand.u32 %s105, 1
          %s212 = smul.addr %s211, 8
          %s213 = scalar_lea.vmem [#allocation11], %s212
          %s215 = ssub.s32 128, 128
          %216 = vsyncadd %s210, %s215
          %s217 = sadd.s32 %s27, %s25
          %s218 = smul.addr %s217, 128
          %s219 = scalar_lea.hbm %s2, %s218
          %s221 = sshll.u32 %s213, 4
          %s222 = int_to_ptr.vmem [resolvable:$true] %s221
          %224 = dma.hbm_to_vmem [thread:$0]  %s219, 128, %s222, %s210
        $region28: #{tpu_custom_call.1} parent=15 // pred_fallthru
          _
      $region16: #{tpu_custom_call.1} parent=5 // pred_fallthru
        _
      %p225 = scmp.le.s32.totalorder 1, %s18
      %p226 = scmp.lt.s32.totalorder %s18, 3
      %p227 = pnand %p225, %p226
      %p228 = pneg %p227
      // Predicated region
      $region29: #{tpu_custom_call.1} parent=5 // pred_check
        _
      $region30: #{tpu_custom_call.1} parent=5 // pred_check_branch
        %230 = sbr.rel (%p227) target = $region32
      $region31: #{tpu_custom_call.1} parent=5 // pred_region
        %s231 = ssub.s32 %s18, 1
        %s232 = sand.u32 %s52, 1
        %s233 = scalar_lea.sflag [#allocation7], %s232
        %s234 = sand.u32 %s52, 1
        %s235 = smul.addr %s234, 8
        %s236 = scalar_lea.vmem [#allocation6], %s235
        // Predicated region
        $region33: #{tpu_custom_call.1} parent=31 // pred_check
          %p237 = pneg %p65
        $region34: #{tpu_custom_call.1} parent=31 // pred_check_branch
          %239 = sbr.rel (%p237) target = $region36
        $region35: #{tpu_custom_call.1} parent=31 // pred_region
          %240 = dma.done %s233, 128
        $region36: #{tpu_custom_call.1} parent=31 // pred_fallthru
          _
        %s241 = sand.u32 %s23, 1
        %s242 = scalar_lea.sflag [#allocation10], %s241
        %s243 = sand.u32 %s80, 1
        %s244 = smul.addr %s243, 8
        %s245 = scalar_lea.vmem [#allocation9], %s244
        // Predicated region
        $region37: #{tpu_custom_call.1} parent=31 // pred_check
          %p246 = pneg %p93
        $region38: #{tpu_custom_call.1} parent=31 // pred_check_branch
          %248 = sbr.rel (%p246) target = $region40
        $region39: #{tpu_custom_call.1} parent=31 // pred_region
          %249 = dma.done %s242, 128
        $region40: #{tpu_custom_call.1} parent=31 // pred_fallthru
          _
        %s250 = sand.u32 %s23, 1
        %s251 = scalar_lea.sflag [#allocation10], %s250
        %s252 = sand.u32 %s108, 1
        %s253 = smul.addr %s252, 8
        %s254 = scalar_lea.vmem [#allocation11], %s253
        // Predicated region
        $region41: #{tpu_custom_call.1} parent=31 // pred_check
          %p255 = pneg %p121
        $region42: #{tpu_custom_call.1} parent=31 // pred_check_branch
          %257 = sbr.rel (%p255) target = $region44
        $region43: #{tpu_custom_call.1} parent=31 // pred_region
          %258 = dma.done %s251, 128
        $region44: #{tpu_custom_call.1} parent=31 // pred_fallthru
          _
        %s259 = sand.u32 %s52, 1
        %s260 = scalar_lea.sflag [#allocation7], %s259
        %s261 = sand.u32 %s52, 1
        %s262 = smul.addr %s261, 8
        %s263 = scalar_lea.vmem [#allocation6], %s262
        %p264 = pneg %p65
        %p265 = pneg %p62
        %s266 = sand.u32 %s23, 1
        %s267 = scalar_lea.sflag [#allocation10], %s266
        %s268 = sand.u32 %s80, 1
        %s269 = smul.addr %s268, 8
        %s270 = scalar_lea.vmem [#allocation9], %s269
        %p271 = pneg %p93
        %p272 = pneg %p90
        %s273 = sand.u32 %s23, 1
        %s274 = scalar_lea.sflag [#allocation10], %s273
        %s275 = sand.u32 %s108, 1
        %s276 = smul.addr %s275, 8
        %s277 = scalar_lea.vmem [#allocation11], %s276
        %p278 = pneg %p121
        %p279 = pneg %p118
        %p280 = pneg %p149
        %p281 = pneg %p146
        %s282 = sand.u32 %s136, 1
        %s283 = scalar_lea.sflag [#allocation8], %s282
        %s284 = sand.u32 %s136, 1
        %s285 = smul.addr %s284, 8
        %s286 = scalar_lea.vmem [#allocation12], %s285
        %p288 = scmp.eq.s32.totalorder %s30, 0
        // Predicated region
        $region45: #{tpu_custom_call.1} parent=31 // pred_check
          %p289 = pneg %p288
        $region46: #{tpu_custom_call.1} parent=31 // pred_check_branch
          %291 = sbr.rel (%p289) target = $region48
        $region47: #{tpu_custom_call.1} parent=31 // pred_region
          %v292 = vld [vmem:[%s236] sm:$0xff]
          %v293 = vmul.f32 %v292, 8.0
          %v294 = vpack.c.bf16 %v293, %v293
          %vm295 = vcmask 519168
          %296 = vst.msk [vmem:[#allocation2] sm:$0xf] %vm295, %v294
          %vm297 = vcmask 7168
          %298 = vst.msk [vmem:[#allocation3] sm:$0xff] %vm297, -inf
          %299 = vst.msk [vmem:[#allocation4] sm:$0xff] %vm297, 0.0
          %vm300 = vcmask 523264
          %301 = vst.msk [vmem:[#allocation5] sm:$0xff] %vm300, 0.0
        $region48: #{tpu_custom_call.1} parent=31 // pred_fallthru
          _
        %v302 = vld [vmem:[#allocation2] sm:$0xf]
        %v303 = vld [vmem:[%s245] sm:$0xff]
        %v304 = vpack.c.bf16 %v303, %v303
        %vm305 = vcmask 523264
        %v307 = vsel %vm305, %v302, 0
        %v310 = vsel %vm305, %v304, 0
        %312 = vmatprep.subr.bf16.mxu0 0
        %313 = vmatpush1.bf16.xpose.msra.mxu0 %v310
        %314 = vmatprep.subr.bf16.mxu0 0
        %315 = vmatpush1.bf16.xpose.msra.mxu0 0
        %316 = vmatprep.subr.bf16.mxu0 0
        %317 = vmatpush1.bf16.xpose.msra.mxu0 0
        %318 = vmatprep.subr.bf16.mxu0 0
        %319 = vmatpush1.bf16.xpose.msra.mxu0 0
        %320 = vmatprep.subr.bf16.mxu0 0
        %321 = vmatpush1.bf16.xpose.msra.mxu0 0
        %322 = vmatprep.subr.bf16.mxu0 0
        %323 = vmatpush1.bf16.xpose.msra.mxu0 0
        %324 = vmatprep.subr.bf16.mxu0 0
        %325 = vmatpush1.bf16.xpose.msra.mxu0 0
        %326 = vmatprep.subr.bf16.mxu0 0
        %327 = vmatpush1.bf16.xpose.msra.mxu0 0
        %328 = vmatprep.subr.bf16.mxu0 0
        %329 = vmatpush1.bf16.xpose.msra.mxu0 0
        %330 = vmatprep.subr.bf16.mxu0 0
        %331 = vmatpush1.bf16.xpose.msra.mxu0 0
        %332 = vmatprep.subr.bf16.mxu0 0
        %333 = vmatpush1.bf16.xpose.msra.mxu0 0
        %334 = vmatprep.subr.bf16.mxu0 0
        %335 = vmatpush1.bf16.xpose.msra.mxu0 0
        %336 = vmatprep.subr.bf16.mxu0 0
        %337 = vmatpush1.bf16.xpose.msra.mxu0 0
        %338 = vmatprep.subr.bf16.mxu0 0
        %339 = vmatpush1.bf16.xpose.msra.mxu0 0
        %340 = vmatprep.subr.bf16.mxu0 0
        %341 = vmatpush1.bf16.xpose.msra.mxu0 0
        %342 = vmatprep.subr.bf16.mxu0 0
        %343 = vmatpush1.bf16.xpose.msra.mxu0 0
        %344 = vmatprep.mubr.bf16.mxu0 0
        %345 = vmatmul.mubr.bf16.gmra.mrb[0].mxu0 %v307
        %v346 = vpop.f32.mrb[0].mxu0
        %v347 = vadd.f32 0.0, %v346
        %v348 = vpop.f32.mrb[0].mxu0
        %v349 = vpop.f32.mrb[0].mxu0
        %v350 = vpop.f32.mrb[0].mxu0
        %351 = vdwg.mxu0
        %v352 = vld [vmem:[#allocation3] sm:$0xff]
        %vm353 = vcmask 64512
        %v354 = vsel %vm353, %v347, -inf
        %355 = vmax.xlane.f32.xlu0 %v354
        %v356 = vpop.xlane.xlu0 %355
        %v357 = vmax.f32 %v352, %v356
        %v358 = vsub.f32 %v352, %v357
        %v359 = vmul.f32 %v358, 1.442695
        %v360 = vpow.pop %v359
        %362 = vset.pattern.permute.xlu0 0
        %363 = vperm.xlu0 %362, %v357
        %v364 = vpop.permute.xlu0 %363
        %v366 = vsub.f32 %v347, %v364
        %v367 = vmul.f32 %v366, 1.442695
        %v368 = vpow.pop %v367
        %v369 = vld [vmem:[#allocation4] sm:$0xff]
        %v370 = vmul.f32 %v360, %v369
        %v371 = vsel %vm353, %v368, 0.0
        %372 = vadd.xlane.f32.xlu0 %v371
        %v373 = vpop.xlane.xlu0 %372
        %v374 = vadd.f32 %v370, %v373
        %vm375 = vcmask 7168
        %376 = vst.msk [vmem:[#allocation4] sm:$0xff] %vm375, %v374
        %v377 = vld [vmem:[#allocation5] sm:$0xff]
        %379 = vset.pattern.permute.xlu0 0
        %380 = vperm.xlu0 %379, %v360
        %v381 = vpop.permute.xlu0 %380
        %v383 = vmul.f32 %v381, %v377
        %v384 = vpack.c.bf16 %v368, %v368
        %v385 = vld [vmem:[%s254] sm:$0xff]
        %v386 = vpack.c.bf16 %v385, %v385
        %v388 = vsel %vm353, %v384, 0
        %vm390 = vcmask 1043456
        %v392 = vsel %vm390, %v386, 0
        %394 = vmatprep.subr.bf16.mxu0 0
        %395 = vmatpush1.bf16.msra.mxu0 %v392
        %396 = vmatprep.subr.bf16.mxu0 0
        %397 = vmatpush1.bf16.msra.mxu0 0
        %398 = vmatprep.subr.bf16.mxu0 0
        %399 = vmatpush1.bf16.msra.mxu0 0
        %400 = vmatprep.subr.bf16.mxu0 0
        %401 = vmatpush1.bf16.msra.mxu0 0
        %402 = vmatprep.subr.bf16.mxu0 0
        %403 = vmatpush1.bf16.msra.mxu0 0
        %404 = vmatprep.subr.bf16.mxu0 0
        %405 = vmatpush1.bf16.msra.mxu0 0
        %406 = vmatprep.subr.bf16.mxu0 0
        %407 = vmatpush1.bf16.msra.mxu0 0
        %408 = vmatprep.subr.bf16.mxu0 0
        %409 = vmatpush1.bf16.msra.mxu0 0
        %410 = vmatprep.subr.bf16.mxu0 0
        %411 = vmatpush1.bf16.msra.mxu0 0
        %412 = vmatprep.subr.bf16.mxu0 0
        %413 = vmatpush1.bf16.msra.mxu0 0
        %414 = vmatprep.subr.bf16.mxu0 0
        %415 = vmatpush1.bf16.msra.mxu0 0
        %416 = vmatprep.subr.bf16.mxu0 0
        %417 = vmatpush1.bf16.msra.mxu0 0
        %418 = vmatprep.subr.bf16.mxu0 0
        %419 = vmatpush1.bf16.msra.mxu0 0
        %420 = vmatprep.subr.bf16.mxu0 0
        %421 = vmatpush1.bf16.msra.mxu0 0
        %422 = vmatprep.subr.bf16.mxu0 0
        %423 = vmatpush1.bf16.msra.mxu0 0
        %424 = vmatprep.subr.bf16.mxu0 0
        %425 = vmatpush1.bf16.msra.mxu0 0
        %426 = vmatprep.mubr.bf16.mxu0 0
        %427 = vmatmul.mubr.bf16.gmra.mrb[0].mxu0 %v388
        %v428 = vpop.f32.mrb[0].mxu0
        %v429 = vadd.f32 0.0, %v428
        %v430 = vpop.f32.mrb[0].mxu0
        %v431 = vpop.f32.mrb[0].mxu0
        %v432 = vpop.f32.mrb[0].mxu0
        %433 = vdwg.mxu0
        %v434 = vadd.f32 %v383, %v429
        %435 = vst.msk [vmem:[#allocation5] sm:$0xff] %vm305, %v434
        %436 = vst.msk [vmem:[#allocation3] sm:$0xff] %vm375, %v357
        // Predicated region
        $region49: #{tpu_custom_call.1} parent=31 // pred_check
          %p437 = pneg %p288
        $region50: #{tpu_custom_call.1} parent=31 // pred_check_branch
          %439 = sbr.rel (%p437) target = $region52
        $region51: #{tpu_custom_call.1} parent=31 // pred_region
          %v440 = vld [vmem:[#allocation4] sm:$0xff]
          %v441 = vrcp.pop %v440
          %v442 = vld [vmem:[#allocation5] sm:$0xff]
          %444 = vset.pattern.permute.xlu0 0
          %445 = vperm.xlu0 %444, %v441
          %v446 = vpop.permute.xlu0 %445
          %v448 = vmul.f32 %v442, %v446
          %449 = vst.msk [vmem:[%s286] sm:$0xff] %vm305, %v448
        $region52: #{tpu_custom_call.1} parent=31 // pred_fallthru
          _
        %s450 = sand.u32 %s136, 1
        %s451 = scalar_lea.sflag [#allocation8], %s450
        %s452 = sand.u32 %s136, 1
        %s453 = smul.addr %s452, 8
        %s454 = scalar_lea.vmem [#allocation12], %s453
        // Predicated region
        $region53: #{tpu_custom_call.1} parent=31 // pred_check
          %p455 = pneg %p146
        $region54: #{tpu_custom_call.1} parent=31 // pred_check_branch
          %457 = sbr.rel (%p455) target = $region56
        $region55: #{tpu_custom_call.1} parent=31 // pred_region
          %s459 = ssub.s32 128, 128
          %460 = vsyncadd %s451, %s459
          %s461 = sadd.s32 %s29, %s28
          %s462 = smul.addr %s461, 128
          %s463 = scalar_lea.hbm %s3, %s462
          %s465 = sshll.u32 %s454, 4
          %s466 = int_to_ptr.vmem [resolvable:$true] %s465
          %468 = dma.vmem_to_hbm [thread:$0]  %s466, 128, %s463, %s451
        $region56: #{tpu_custom_call.1} parent=31 // pred_fallthru
          _
      $region32: #{tpu_custom_call.1} parent=5 // pred_fallthru
        _
      %p469 = scmp.le.s32.totalorder 2, %s18
      // Predicated region
      $region57: #{tpu_custom_call.1} parent=5 // pred_check
        %p470 = pneg %p469
      $region58: #{tpu_custom_call.1} parent=5 // pred_check_branch
        %472 = sbr.rel (%p470) target = $region60
      $region59: #{tpu_custom_call.1} parent=5 // pred_region
        %s473 = ssub.s32 %s18, 2
        // Predicated region
        $region61: #{tpu_custom_call.1} parent=59 // pred_check
          %p474 = pneg %p152
        $region62: #{tpu_custom_call.1} parent=59 // pred_check_branch
          %476 = sbr.rel (%p474) target = $region64
        $region63: #{tpu_custom_call.1} parent=59 // pred_region
          %s477 = sand.u32 %s137, 1
          %s478 = scalar_lea.sflag [#allocation8], %s477
          %s479 = sand.u32 %s137, 1
          %s480 = smul.addr %s479, 8
          %s481 = scalar_lea.vmem [#allocation12], %s480
          %482 = dma.done %s478, 128
        $region64: #{tpu_custom_call.1} parent=59 // pred_fallthru
          _
      $region60: #{tpu_custom_call.1} parent=5 // pred_fallthru
        _
    $region6: #{tpu_custom_call.1} parent=1 // loop_footer
      %s22 = sadd.s32 1, %s18
    $region7: #{tpu_custom_call.1} parent=1 // loop_footer_branch
      %17 = sbr.rel target = $region3
    $region8: #{tpu_custom_call.1} parent=1 // loop_exit
      _
    %483 = vsyncpa [#allocation7], 1
    %s484 = scalar_lea.sflag [#allocation7], 1
    %485 = vsyncpa %s484, 1
    %486 = vsyncpa [#allocation10], 1
    %s487 = scalar_lea.sflag [#allocation10], 1
    %488 = vsyncpa %s487, 1
    %489 = vsyncpa [#allocation8], 1
    %s490 = scalar_lea.sflag [#allocation8], 1
    %491 = vsyncpa %s490, 1

</llo_original>
